<compile_context>
chip_gen: v7x
topology: tpu7x:2x2x1
jax: 0.10.0
libtpu: 0.0.40
codegen_flags: <defaults>
</compile_context>

<pallas_src>
import functools

import jax
import jax.numpy as jnp
from jax.experimental import pallas as pl
from jax.experimental.pallas import tpu as pltpu


def _round_up(x, m):
    return ((x + m - 1) // m) * m


def _choose_tile_rows(rows_aligned, c, itemsize, align, vmem_budget_bytes=8 << 20):
    """Pick TR (rows of 128 lanes per spatial tile).

    Keeps 2 double-buffered logits tiles (2 * C * TR * 128 * itemsize) under the
    budget, preferring a TR that divides the row count (no pad copy). Falls back
    to padding rows when no reasonable divisor exists.
    """
    tr_max = (vmem_budget_bytes // (2 * c * 128 * itemsize)) // align * align
    tr_max = max(align, tr_max)
    tr_max = min(tr_max, rows_aligned)
    for cand in range(tr_max, align - 1, -align):
        if rows_aligned % cand == 0:
            if cand >= 128 or cand == rows_aligned or cand == tr_max:
                return cand, rows_aligned
            break
    # Pathological row count: accept padding to a multiple of tr_max.
    return tr_max, _round_up(rows_aligned, tr_max)


def _make_kernel(C, TR, gamma, ignore_lb, n_batch):
    g = float(gamma)

    def kernel(x_ref, y_ref, sum_out, cnt_out, sum_acc, cnt_acc):
        i = pl.program_id(1)  # batch index = innermost reduction axis

        @pl.when(i == 0)
        def _():
            sum_acc[...] = jnp.zeros_like(sum_acc)
            cnt_acc[...] = jnp.zeros_like(cnt_acc)

        # Per-tile cast to f32 (HBM may hold bf16/f32; compute stays f32).
        x = x_ref[...].astype(jnp.float32)      # (1, C, TR, 128)
        y = y_ref[...]                          # (1, TR, 128) int32

        # Softmax statistics; channel axis is leading -> pure VPU accumulation
        # across the C vreg slabs (no cross-lane reduce).
        m = jnp.max(x, axis=1)                  # (1, TR, 128)
        e = jnp.exp(x - m[:, None])             # (1, C, TR, 128)
        den = jnp.sum(e, axis=1)                # (1, TR, 128)

        # Pick the label channel via one-hot masked channel-sum (no gather).
        cidx = jax.lax.broadcasted_iota(jnp.int32, (1, C, 1, 1), 1)
        onehot = y[:, None] == cidx                           # (1, C, TR, 128)
        x_y = jnp.sum(jnp.where(onehot, x, 0.0), axis=1)      # (1, TR, 128)

        # log-softmax / softmax evaluated only at the picked channel.
        logp_y = (x_y - m) - jnp.log(den)        # (1, TR, 128)
        p_y = jnp.exp(logp_y)                    # EUP exp replaces masked-sum + divide
        one_m = jnp.maximum(1.0 - p_y, 0.0)

        if g.is_integer() and g >= 0.0:
            gi = int(g)
            if gi == 0:
                factor = jnp.ones_like(one_m)
            else:
                factor = one_m
                for _ in range(gi - 1):
                    factor = factor * one_m
        else:
            factor = jnp.power(one_m, jnp.float32(g))

        valid = y != ignore_lb                   # padded pixels carry ignore_lb
        contrib = jnp.where(valid, -factor * logp_y, 0.0)     # (1, TR, 128)

        # Per-lane partial accumulation: split TR at vreg boundaries and add the
        # slabs together (VPU only); single XLU reduce deferred to the epilogue.
        sum_acc[...] += jnp.sum(contrib.reshape(TR // 8, 8, 128), axis=0)
        cnt_acc[...] += jnp.sum(
            valid.astype(jnp.float32).reshape(TR // 8, 8, 128), axis=0)

        @pl.when(i == n_batch - 1)
        def _():
            sum_out[...] = sum_acc[...][None]
            cnt_out[...] = cnt_acc[...][None]

    return kernel


@functools.partial(jax.jit, static_argnames=("gamma", "ignore_lb"))
def softmax_focal_loss(logits, labels, gamma=2.0, ignore_lb=255):
    """logits: (N, C, H, W) float array; labels: (N, H, W) int array. Returns scalar loss."""
    n, c, h, w = logits.shape
    hw = h * w
    labels = labels.astype(jnp.int32)

    itemsize = jnp.dtype(logits.dtype).itemsize
    align = {4: 8, 2: 16, 1: 32}.get(itemsize, 8)   # sublane alignment per dtype

    rows = -(-hw // 128)
    rows_aligned = _round_up(rows, align)
    tr, rows_pad = _choose_tile_rows(rows_aligned, c, itemsize, align)
    hw_pad = rows_pad * 128

    # Flatten spatial to a lane-dense (rows, 128) layout (free reshape for NCHW).
    x = logits.reshape(n, c, hw)
    y = labels.reshape(n, hw)
    if hw_pad != hw:
        # Padded pixels carry ignore_lb so they contribute neither sum nor count.
        x = jnp.pad(x, ((0, 0), (0, 0), (0, hw_pad - hw)))
        y = jnp.pad(y, ((0, 0), (0, hw_pad - hw)), constant_values=ignore_lb)
    x = x.reshape(n, c, rows_pad, 128)
    y = y.reshape(n, rows_pad, 128)

    num_tiles = rows_pad // tr
    kernel = _make_kernel(c, tr, float(gamma), ignore_lb, n)

    sum_p, cnt_p = pl.pallas_call(
        kernel,
        out_shape=(
            jax.ShapeDtypeStruct((num_tiles, 8, 128), jnp.float32),
            jax.ShapeDtypeStruct((num_tiles, 8, 128), jnp.float32),
        ),
        grid_spec=pltpu.PrefetchScalarGridSpec(
            num_scalar_prefetch=0,
            # Spatial tiles outer (parallel, shardable across v7x TCs),
            # batch inner (arbitrary, carries the VMEM accumulators).
            grid=(num_tiles, n),
            in_specs=[
                pl.BlockSpec((1, c, tr, 128), lambda j, i: (i, 0, j, 0)),
                pl.BlockSpec((1, tr, 128), lambda j, i: (i, j, 0)),
            ],
            out_specs=[
                pl.BlockSpec((1, 8, 128), lambda j, i: (j, 0, 0)),
                pl.BlockSpec((1, 8, 128), lambda j, i: (j, 0, 0)),
            ],
            scratch_shapes=[
                pltpu.VMEM((8, 128), jnp.float32),  # per-lane partial loss sums
                pltpu.VMEM((8, 128), jnp.float32),  # per-lane partial valid counts
            ],
        ),
        compiler_params=pltpu.CompilerParams(
            dimension_semantics=("parallel", "arbitrary"),
            vmem_limit_bytes=48 << 20,  # safe on v7x (64 MiB) and v5e/v6e (128 MiB)
        ),
    )(x, y)

    total = jnp.sum(sum_p)
    # Per-lane counts are small exact integers in f32 -> cast and sum exactly in int32.
    count = jnp.sum(cnt_p.astype(jnp.int32))
    # NOTE: if every pixel is ignored, count == 0 and the result is NaN/Inf,
    # matching PyTorch NLLLoss(reduction='mean') behavior.
    return total / count.astype(jnp.float32)


def _reference(logits, labels, gamma=2.0, ignore_lb=255):
    """Pure-JAX reference mirroring the PyTorch module, for a correctness check."""
    scores = jax.nn.softmax(logits, axis=1)
    factor = jnp.power(1.0 - scores, gamma)
    log_score = factor * jax.nn.log_softmax(logits, axis=1)
    valid = labels != ignore_lb
    labels_safe = jnp.where(valid, labels, 0)
    picked = jnp.take_along_axis(log_score, labels_safe[:, None, :, :], axis=1)[:, 0]
    return -jnp.sum(jnp.where(valid, picked, 0.0)) / jnp.sum(valid)


if __name__ == "__main__":
    key = jax.random.PRNGKey(0)
    k1, k2, k3 = jax.random.split(key, 3)

    N, C, H, W = 2, 4, 16, 16
    gamma = 2.0
    ignore_lb = 255

    logits = jax.random.normal(k1, (N, C, H, W), dtype=jnp.float32)
    labels = jax.random.randint(k2, (N, H, W), 0, C)
    # sprinkle some ignored pixels
    ignore_mask = jax.random.uniform(k3, (N, H, W)) < 0.1
    labels = jnp.where(ignore_mask, ignore_lb, labels).astype(jnp.int32)

    loss = softmax_focal_loss(logits, labels, gamma=gamma, ignore_lb=ignore_lb)
    loss = jax.block_until_ready(loss)

    ref = jax.block_until_ready(_reference(logits, labels, gamma=gamma, ignore_lb=ignore_lb))
    assert jnp.allclose(loss, ref, atol=1e-5, rtol=1e-5), (loss, ref)

    print("KERNEL_OK")
</pallas_src>

<mosaic_0001>
module attributes {stable_mosaic.version = 11 : i64} {
  func.func @kernel(%arg0: i32, %arg1: i32, %arg2: memref<1x4x8x128xf32, #tpu.memory_space<vmem>>, %arg3: memref<1x8x128xi32, #tpu.memory_space<vmem>>, %arg4: memref<1x8x128xf32, #tpu.memory_space<vmem>>, %arg5: memref<1x8x128xf32, #tpu.memory_space<vmem>>, %arg6: memref<8x128xf32, #tpu.memory_space<vmem>>, %arg7: memref<8x128xf32, #tpu.memory_space<vmem>>) attributes {dimension_semantics = [#tpu.dimension_semantics<parallel>, #tpu.dimension_semantics<arbitrary>], iteration_bounds = array<i64: 1, 2>, scalar_prefetch = 0 : i64, scratch_operands = 2 : i64, tpu.core_type = #tpu.core_type<tc>, window_params = [{transform_indices = @transform_0, window_bounds = array<i64: 1, 4, 8, 128>}, {transform_indices = @transform_1, window_bounds = array<i64: 1, 8, 128>}, {transform_indices = @transform_2, window_bounds = array<i64: 1, 8, 128>}, {transform_indices = @transform_3, window_bounds = array<i64: 1, 8, 128>}]} {
    %c0_i32 = arith.constant 0 : i32
    %0 = arith.cmpi eq, %arg1, %c0_i32 : i32
    %1 = arith.extui %0 : i1 to i32
    %c0_i32_0 = arith.constant 0 : i32
    %2 = arith.cmpi ne, %1, %c0_i32_0 : i32
    scf.if %2 {
      %cst_25 = arith.constant 0.000000e+00 : f32
      %48 = vector.broadcast %cst_25 : f32 to vector<8x128xf32>
      %c0_26 = arith.constant 0 : index
      %c0_27 = arith.constant 0 : index
      %49 = vector.load %arg6[%c0_26, %c0_27] : memref<8x128xf32, #tpu.memory_space<vmem>>, vector<8x128xf32>
      tpu.vector_store %arg6[%c0_26, %c0_27], %48 {strides = array<i32>} : memref<8x128xf32, #tpu.memory_space<vmem>>, vector<8x128xf32>,
      %cst_28 = arith.constant 0.000000e+00 : f32
      %50 = vector.broadcast %cst_28 : f32 to vector<8x128xf32>
      %c0_29 = arith.constant 0 : index
      %c0_30 = arith.constant 0 : index
      %51 = vector.load %arg7[%c0_29, %c0_30] : memref<8x128xf32, #tpu.memory_space<vmem>>, vector<8x128xf32>
      tpu.vector_store %arg7[%c0_29, %c0_30], %50 {strides = array<i32>} : memref<8x128xf32, #tpu.memory_space<vmem>>, vector<8x128xf32>,
    } else {
    }
    %c0 = arith.constant 0 : index
    %c0_1 = arith.constant 0 : index
    %c0_2 = arith.constant 0 : index
    %c0_3 = arith.constant 0 : index
    %3 = vector.load %arg2[%c0, %c0_1, %c0_2, %c0_3] : memref<1x4x8x128xf32, #tpu.memory_space<vmem>>, vector<1x4x8x128xf32>
    %c0_4 = arith.constant 0 : index
    %c0_5 = arith.constant 0 : index
    %c0_6 = arith.constant 0 : index
    %4 = vector.load %arg3[%c0_4, %c0_5, %c0_6] : memref<1x8x128xi32, #tpu.memory_space<vmem>>, vector<1x8x128xi32>
    %cst = arith.constant dense<0xFF800000> : vector<1x8x128xf32>
    %5 = vector.multi_reduction <maximumf>, %3, %cst [1] : vector<1x4x8x128xf32> to vector<1x8x128xf32>
    %6 = vector.shape_cast %5 : vector<1x8x128xf32> to vector<1x1x8x128xf32>
    %7 = vector.broadcast %6 : vector<1x1x8x128xf32> to vector<1x4x8x128xf32>
    %8 = arith.subf %3, %7 : vector<1x4x8x128xf32>
    %9 = math.exp %8 : vector<1x4x8x128xf32>
    %cst_7 = arith.constant dense<0.000000e+00> : vector<1x8x128xf32>
    %10 = vector.multi_reduction <add>, %9, %cst_7 [1] : vector<1x4x8x128xf32> to vector<1x8x128xf32>
    %11 = tpu.iota {dimensions = array<i32: 1>} : vector<1x4x1x1xi32>
    %12 = vector.shape_cast %4 : vector<1x8x128xi32> to vector<1x1x8x128xi32>
    %13 = vector.broadcast %12 : vector<1x1x8x128xi32> to vector<1x4x8x128xi32>
    %14 = vector.broadcast %11 : vector<1x4x1x1xi32> to vector<1x4x8x128xi32>
    %15 = arith.cmpi eq, %13, %14 : vector<1x4x8x128xi32>
    %cst_8 = arith.constant 0.000000e+00 : f32
    %16 = vector.broadcast %cst_8 : f32 to vector<1x4x8x128xf32>
    %17 = arith.select %15, %3, %16 : vector<1x4x8x128xi1>, vector<1x4x8x128xf32>
    %cst_9 = arith.constant dense<0.000000e+00> : vector<1x8x128xf32>
    %18 = vector.multi_reduction <add>, %17, %cst_9 [1] : vector<1x4x8x128xf32> to vector<1x8x128xf32>
    %19 = arith.subf %18, %5 : vector<1x8x128xf32>
    %20 = math.log %10 : vector<1x8x128xf32>
    %21 = arith.subf %19, %20 : vector<1x8x128xf32>
    %22 = math.exp %21 : vector<1x8x128xf32>
    %cst_10 = arith.constant 1.000000e+00 : f32
    %23 = vector.broadcast %cst_10 : f32 to vector<1x8x128xf32>
    %24 = arith.subf %23, %22 : vector<1x8x128xf32>
    %cst_11 = arith.constant 0.000000e+00 : f32
    %25 = vector.broadcast %cst_11 : f32 to vector<1x8x128xf32>
    %26 = arith.maximumf %24, %25 : vector<1x8x128xf32>
    %27 = arith.mulf %26, %26 : vector<1x8x128xf32>
    %c255_i32 = arith.constant 255 : i32
    %28 = vector.broadcast %c255_i32 : i32 to vector<1x8x128xi32>
    %29 = arith.cmpi ne, %4, %28 : vector<1x8x128xi32>
    %cst_12 = arith.constant 0.000000e+00 : f32
    %30 = vector.broadcast %cst_12 : f32 to vector<1x8x128xf32>
    %31 = arith.subf %30, %27 : vector<1x8x128xf32>
    %32 = arith.mulf %31, %21 : vector<1x8x128xf32>
    %cst_13 = arith.constant 0.000000e+00 : f32
    %33 = vector.broadcast %cst_13 : f32 to vector<1x8x128xf32>
    %34 = arith.select %29, %32, %33 : vector<1x8x128xi1>, vector<1x8x128xf32>
    %c0_14 = arith.constant 0 : index
    %c0_15 = arith.constant 0 : index
    %35 = vector.load %arg6[%c0_14, %c0_15] : memref<8x128xf32, #tpu.memory_space<vmem>>, vector<8x128xf32>
    %cst_16 = arith.constant dense<0.000000e+00> : vector<8x128xf32>
    %36 = vector.multi_reduction <add>, %34, %cst_16 [0] : vector<1x8x128xf32> to vector<8x128xf32>
    %37 = arith.addf %35, %36 : vector<8x128xf32>
    %c0_17 = arith.constant 0 : index
    %c0_18 = arith.constant 0 : index
    %38 = vector.load %arg6[%c0_17, %c0_18] : memref<8x128xf32, #tpu.memory_space<vmem>>, vector<8x128xf32>
    tpu.vector_store %arg6[%c0_17, %c0_18], %37 {strides = array<i32>} : memref<8x128xf32, #tpu.memory_space<vmem>>, vector<8x128xf32>,
    %c0_19 = arith.constant 0 : index
    %c0_20 = arith.constant 0 : index
    %39 = vector.load %arg7[%c0_19, %c0_20] : memref<8x128xf32, #tpu.memory_space<vmem>>, vector<8x128xf32>
    %40 = arith.extui %29 : vector<1x8x128xi1> to vector<1x8x128xi32>
    %41 = arith.sitofp %40 : vector<1x8x128xi32> to vector<1x8x128xf32>
    %cst_21 = arith.constant dense<0.000000e+00> : vector<8x128xf32>
    %42 = vector.multi_reduction <add>, %41, %cst_21 [0] : vector<1x8x128xf32> to vector<8x128xf32>
    %43 = arith.addf %39, %42 : vector<8x128xf32>
    %c0_22 = arith.constant 0 : index
    %c0_23 = arith.constant 0 : index
    %44 = vector.load %arg7[%c0_22, %c0_23] : memref<8x128xf32, #tpu.memory_space<vmem>>, vector<8x128xf32>
    tpu.vector_store %arg7[%c0_22, %c0_23], %43 {strides = array<i32>} : memref<8x128xf32, #tpu.memory_space<vmem>>, vector<8x128xf32>,
    %c1_i32 = arith.constant 1 : i32
    %45 = arith.cmpi eq, %arg1, %c1_i32 : i32
    %46 = arith.extui %45 : i1 to i32
    %c0_i32_24 = arith.constant 0 : i32
    %47 = arith.cmpi ne, %46, %c0_i32_24 : i32
    scf.if %47 {
      %c0_25 = arith.constant 0 : index
      %c0_26 = arith.constant 0 : index
      %48 = vector.load %arg6[%c0_25, %c0_26] : memref<8x128xf32, #tpu.memory_space<vmem>>, vector<8x128xf32>
      %49 = vector.shape_cast %48 : vector<8x128xf32> to vector<1x8x128xf32>
      %c0_27 = arith.constant 0 : index
      %c0_28 = arith.constant 0 : index
      %c0_29 = arith.constant 0 : index
      %50 = vector.load %arg4[%c0_27, %c0_28, %c0_29] : memref<1x8x128xf32, #tpu.memory_space<vmem>>, vector<1x8x128xf32>
      tpu.vector_store %arg4[%c0_27, %c0_28, %c0_29], %49 {strides = array<i32>} : memref<1x8x128xf32, #tpu.memory_space<vmem>>, vector<1x8x128xf32>,
      %c0_30 = arith.constant 0 : index
      %c0_31 = arith.constant 0 : index
      %51 = vector.load %arg7[%c0_30, %c0_31] : memref<8x128xf32, #tpu.memory_space<vmem>>, vector<8x128xf32>
      %52 = vector.shape_cast %51 : vector<8x128xf32> to vector<1x8x128xf32>
      %c0_32 = arith.constant 0 : index
      %c0_33 = arith.constant 0 : index
      %c0_34 = arith.constant 0 : index
      %53 = vector.load %arg5[%c0_32, %c0_33, %c0_34] : memref<1x8x128xf32, #tpu.memory_space<vmem>>, vector<1x8x128xf32>
      tpu.vector_store %arg5[%c0_32, %c0_33, %c0_34], %52 {strides = array<i32>} : memref<1x8x128xf32, #tpu.memory_space<vmem>>, vector<1x8x128xf32>,
    } else {
    }
    return
  }
  func.func @transform_0(%arg0: i32, %arg1: i32) -> (i32, i32, i32, i32) {
    %c0_i32 = arith.constant 0 : i32
    %c0_i32_0 = arith.constant 0 : i32
    %c0_i32_1 = arith.constant 0 : i32
    return %arg1, %c0_i32, %arg0, %c0_i32_0 : i32, i32, i32, i32
  }
  func.func @transform_1(%arg0: i32, %arg1: i32) -> (i32, i32, i32) {
    %c0_i32 = arith.constant 0 : i32
    %c0_i32_0 = arith.constant 0 : i32
    return %arg1, %arg0, %c0_i32 : i32, i32, i32
  }
  func.func @transform_2(%arg0: i32, %arg1: i32) -> (i32, i32, i32) {
    %c0_i32 = arith.constant 0 : i32
    %c0_i32_0 = arith.constant 0 : i32
    %c0_i32_1 = arith.constant 0 : i32
    return %arg0, %c0_i32, %c0_i32_0 : i32, i32, i32
  }
  func.func @transform_3(%arg0: i32, %arg1: i32) -> (i32, i32, i32) {
    %c0_i32 = arith.constant 0 : i32
    %c0_i32_0 = arith.constant 0 : i32
    %c0_i32_1 = arith.constant 0 : i32
    return %arg0, %c0_i32, %c0_i32_0 : i32, i32, i32
  }
}

</mosaic_0001>

<llo_original>
// kernel: softmax_focal_loss.1
$region0: #{softmax_focal_loss.1}
  #allocation0 [shape = 'u32[]', space=smem, size = 0x4, offset = 0x4, fixed_abs, tag = 'smem constant byte address 0x4 - core index']
  #allocation1 [shape = 'u32[144,128]{1,0:T(1,128)}', space=vmem, size = 0x12000, scoped, tag = 'internal scratch']
  #allocation2 [shape = 'f32[8,128]{1,0:T(8,128)}', space=vmem, size = 0x1000, scoped, tag = 'scratch operand']
  #allocation3 [shape = 'f32[8,128]{1,0:T(8,128)}', space=vmem, size = 0x1000, scoped, tag = 'scratch operand']
  %s0 = inlined_call_operand.vmem [shape: f32[2,4,8,128], index: 0, kind: input, shape index: {}]
  %s1 = inlined_call_operand.vmem [shape: s32[2,8,128], index: 1, kind: input, shape index: {}]
  %s2 = inlined_call_operand.vmem [shape: f32[1,8,128], index: 2, kind: output, shape index: {0}]
  %s3 = inlined_call_operand.vmem [shape: f32[1,8,128], index: 3, kind: output, shape index: {1}]
  %4 = xla_tuple %s2, %s3
  %s5 = sld [smem:[#allocation0]]
  $region57: #{softmax_focal_loss.1} parent=0
    _
  %s7 = ssub.s32 1, %s5
  %s8 = scalar_select 0, %s7, %s5
  loop: start=0, step=1, limit=4
  $region2: #{softmax_focal_loss.1} parent=0 // loop_pre_header
    _
  $region3: #{softmax_focal_loss.1} parent=0 // loop_header
    %s10 = sphi 0, %s14
    %p11 = scmp.ge.s32.totalorder %s10, 4
    %s17 = sphi 0, %s29
    %s18 = sphi 0, %s25
    %s19 = sphi 0, %s17
    %s20 = sphi 0, %s18
    %s21 = sphi 0, %s19
    %s22 = sphi 0, %s20
    %s34 = sphi 0, %s36
    %s37 = sphi 0, %s34
    %s38 = sphi 0, %s37
    %s54 = sphi 0, %s38
    %s62 = sphi 0, %s64
    %s65 = sphi 0, %s62
    %s66 = sphi 0, %s65
    %s82 = sphi 0, %s66
    %s88 = sphi 0, %s90
    %s91 = sphi 0, %s88
    %s92 = sphi 0, %s91
    %s108 = sphi 0, %s92
    %s114 = sphi 0, %s116
    %s117 = sphi 0, %s114
    %s118 = sphi 0, %s117
    %s134 = sphi 0, %s118
  $region4: #{softmax_focal_loss.1} parent=0 // loop_header_branch
    %13 = sbr.rel (%p11) target = $region8
  $region5: #{softmax_focal_loss.1} parent=0 // loop_body
    %s15 = ssub.s32 %s10, 1
    %s16 = ssub.s32 %s10, 2
    %s23 = sadd.s32 1, %s18
    %p24 = scmp.ge.s32.totalorder %s23, 2
    %s25 = scalar_select %p24, 0, %s23
    %s26 = sadd.s32 1, %s17
    %s27 = scalar_select %p24, %s26, %s17
    %p28 = scmp.ge.s32.totalorder %s27, 1
    %s29 = scalar_select %p28, 0, %s27
    %s30 = ssub.s32 %s18, %s25
    %s31 = ssub.s32 %s17, %s29
    %s32 = sor.u32 %s30, %s31
    %p33 = scmp.eq.s32.totalorder %s32, 0
    %s35 = sadd.s32 %s34, 1
    %s36 = scalar_select %p33, %s34, %s35
    %p39 = pneg %p33
    %p40 = scmp.eq.s32.totalorder %s10, 1
    %p41 = por %p39, %p40
    %p42 = scmp.ne.s32.totalorder %s34, %s37
    %p43 = scmp.eq.s32.totalorder %s10, 0
    %p44 = por %p42, %p43
    %p45 = scmp.ne.s32.totalorder %s34, %s37
    %p46 = scmp.eq.s32.totalorder %s15, 1
    %p47 = por %p45, %p46
    %p48 = scmp.ne.s32.totalorder %s37, %s38
    %p49 = scmp.eq.s32.totalorder %s15, 0
    %p50 = por %p48, %p49
    %p51 = scmp.ne.s32.totalorder %s37, %s38
    %p52 = scmp.eq.s32.totalorder %s16, 1
    %p53 = por %p51, %p52
    %p55 = scmp.ne.s32.totalorder %s38, %s54
    %p56 = scmp.eq.s32.totalorder %s16, 0
    %p57 = por %p55, %p56
    %s58 = ssub.s32 %s18, %s25
    %s59 = ssub.s32 %s17, %s29
    %s60 = sor.u32 %s58, %s59
    %p61 = scmp.eq.s32.totalorder %s60, 0
    %s63 = sadd.s32 %s62, 1
    %s64 = scalar_select %p61, %s62, %s63
    %p67 = pneg %p61
    %p68 = scmp.eq.s32.totalorder %s10, 1
    %p69 = por %p67, %p68
    %p70 = scmp.ne.s32.totalorder %s62, %s65
    %p71 = scmp.eq.s32.totalorder %s10, 0
    %p72 = por %p70, %p71
    %p73 = scmp.ne.s32.totalorder %s62, %s65
    %p74 = scmp.eq.s32.totalorder %s15, 1
    %p75 = por %p73, %p74
    %p76 = scmp.ne.s32.totalorder %s65, %s66
    %p77 = scmp.eq.s32.totalorder %s15, 0
    %p78 = por %p76, %p77
    %p79 = scmp.ne.s32.totalorder %s65, %s66
    %p80 = scmp.eq.s32.totalorder %s16, 1
    %p81 = por %p79, %p80
    %p83 = scmp.ne.s32.totalorder %s66, %s82
    %p84 = scmp.eq.s32.totalorder %s16, 0
    %p85 = por %p83, %p84
    %s86 = ssub.s32 %s17, %s29
    %p87 = scmp.eq.s32.totalorder %s86, 0
    %s89 = sadd.s32 %s88, 1
    %s90 = scalar_select %p87, %s88, %s89
    %p93 = pneg %p87
    %p94 = scmp.eq.s32.totalorder %s10, 1
    %p95 = por %p93, %p94
    %p96 = scmp.ne.s32.totalorder %s88, %s91
    %p97 = scmp.eq.s32.totalorder %s10, 0
    %p98 = por %p96, %p97
    %p99 = scmp.ne.s32.totalorder %s88, %s91
    %p100 = scmp.eq.s32.totalorder %s15, 1
    %p101 = por %p99, %p100
    %p102 = scmp.ne.s32.totalorder %s91, %s92
    %p103 = scmp.eq.s32.totalorder %s15, 0
    %p104 = por %p102, %p103
    %p105 = scmp.ne.s32.totalorder %s91, %s92
    %p106 = scmp.eq.s32.totalorder %s16, 1
    %p107 = por %p105, %p106
    %p109 = scmp.ne.s32.totalorder %s92, %s108
    %p110 = scmp.eq.s32.totalorder %s16, 0
    %p111 = por %p109, %p110
    %s112 = ssub.s32 %s17, %s29
    %p113 = scmp.eq.s32.totalorder %s112, 0
    %s115 = sadd.s32 %s114, 1
    %s116 = scalar_select %p113, %s114, %s115
    %p119 = pneg %p113
    %p120 = scmp.eq.s32.totalorder %s10, 1
    %p121 = por %p119, %p120
    %p122 = scmp.ne.s32.totalorder %s114, %s117
    %p123 = scmp.eq.s32.totalorder %s10, 0
    %p124 = por %p122, %p123
    %p125 = scmp.ne.s32.totalorder %s114, %s117
    %p126 = scmp.eq.s32.totalorder %s15, 1
    %p127 = por %p125, %p126
    %p128 = scmp.ne.s32.totalorder %s117, %s118
    %p129 = scmp.eq.s32.totalorder %s15, 0
    %p130 = por %p128, %p129
    %p131 = scmp.ne.s32.totalorder %s117, %s118
    %p132 = scmp.eq.s32.totalorder %s16, 1
    %p133 = por %p131, %p132
    %p135 = scmp.ne.s32.totalorder %s118, %s134
    %p136 = scmp.eq.s32.totalorder %s16, 0
    %p137 = por %p135, %p136
    %p138 = scmp.le.s32.totalorder 1, %s10
    %p139 = scmp.lt.s32.totalorder %s10, 3
    %p140 = pnand %p138, %p139
    %p141 = pneg %p140
    // Predicated region
    $region9: #{softmax_focal_loss.1} parent=5 // pred_check
      _
    $region10: #{softmax_focal_loss.1} parent=5 // pred_check_branch
      %143 = sbr.rel (%p140) target = $region12
    $region11: #{softmax_focal_loss.1} parent=5 // pred_region
      %s144 = ssub.s32 %s10, 1
    $region12: #{softmax_focal_loss.1} parent=5 // pred_fallthru
      _
    %p145 = scmp.lt.s32.totalorder %s10, 2
    // Predicated region
    $region13: #{softmax_focal_loss.1} parent=5 // pred_check
      %p146 = pneg %p145
    $region14: #{softmax_focal_loss.1} parent=5 // pred_check_branch
      %148 = sbr.rel (%p146) target = $region16
    $region15: #{softmax_focal_loss.1} parent=5 // pred_region
      // Predicated region
      $region17: #{softmax_focal_loss.1} parent=15 // pred_check
        %p149 = pneg %p44
      $region18: #{softmax_focal_loss.1} parent=15 // pred_check_branch
        %151 = sbr.rel (%p149) target = $region20
      $region19: #{softmax_focal_loss.1} parent=15 // pred_region
        %p152 = scmp.lt.s32.totalorder %s18, 1
        %s153 = scalar_select %p152, %s18, 1
        %p154 = scmp.lt.s32.totalorder %s17, 0
        %s155 = scalar_select %p154, %s17, 0
        %s156 = smul.addr %s153, 4
        %s157 = sadd.s32 %s155, %s156
        %s158 = smul.addr %s157, 8
        %s159 = scalar_lea.vmem %s0, %s158
      $region20: #{softmax_focal_loss.1} parent=15 // pred_fallthru
        _
      // Predicated region
      $region21: #{softmax_focal_loss.1} parent=15 // pred_check
        %p160 = pneg %p72
      $region22: #{softmax_focal_loss.1} parent=15 // pred_check_branch
        %162 = sbr.rel (%p160) target = $region24
      $region23: #{softmax_focal_loss.1} parent=15 // pred_region
        %p163 = scmp.lt.s32.totalorder %s18, 1
        %s164 = scalar_select %p163, %s18, 1
        %p165 = scmp.lt.s32.totalorder %s17, 0
        %s166 = scalar_select %p165, %s17, 0
        %s167 = sadd.s32 %s166, %s164
        %s168 = smul.addr %s167, 8
        %s169 = scalar_lea.vmem %s1, %s168
      $region24: #{softmax_focal_loss.1} parent=15 // pred_fallthru
        _
    $region16: #{softmax_focal_loss.1} parent=5 // pred_fallthru
      _
    %p170 = scmp.le.s32.totalorder 1, %s10
    %p171 = scmp.lt.s32.totalorder %s10, 3
    %p172 = pnand %p170, %p171
    %p173 = pneg %p172
    // Predicated region
    $region25: #{softmax_focal_loss.1} parent=5 // pred_check
      _
    $region26: #{softmax_focal_loss.1} parent=5 // pred_check_branch
      %175 = sbr.rel (%p172) target = $region28
    $region27: #{softmax_focal_loss.1} parent=5 // pred_region
      %s176 = ssub.s32 %s10, 1
      %p177 = scmp.lt.s32.totalorder %s20, 1
      %s178 = scalar_select %p177, %s20, 1
      %p179 = scmp.lt.s32.totalorder %s19, 0
      %s180 = scalar_select %p179, %s19, 0
      %s181 = smul.addr %s178, 4
      %s182 = sadd.s32 %s180, %s181
      %s183 = smul.addr %s182, 8
      %s184 = scalar_lea.vmem %s0, %s183
      %p185 = pneg %p50
      %p186 = pneg %p47
      %p187 = scmp.lt.s32.totalorder %s20, 1
      %s188 = scalar_select %p187, %s20, 1
      %p189 = scmp.lt.s32.totalorder %s19, 0
      %s190 = scalar_select %p189, %s19, 0
      %s191 = sadd.s32 %s190, %s188
      %s192 = smul.addr %s191, 8
      %s193 = scalar_lea.vmem %s1, %s192
      %p194 = pneg %p78
      %p195 = pneg %p75
      %p196 = pneg %p104
      %p197 = pneg %p101
      %p198 = scmp.lt.s32.totalorder %s19, 0
      %s199 = scalar_select %p198, %s19, 0
      %s200 = smul.addr %s199, 8
      %s201 = scalar_lea.vmem %s2, %s200
      %p202 = pneg %p130
      %p203 = pneg %p127
      %p204 = scmp.lt.s32.totalorder %s19, 0
      %s205 = scalar_select %p204, %s19, 0
      %s206 = smul.addr %s205, 8
      %s207 = scalar_lea.vmem %s3, %s206
      %p208 = scmp.lt.s32.totalorder %s20, 1
      %s209 = scalar_select %p208, %s20, 1
      %p210 = scmp.lt.s32.totalorder %s19, 0
      %s211 = scalar_select %p210, %s19, 0
      %s212 = smul.addr %s209, 4
      %s213 = sadd.s32 %s211, %s212
      %s214 = smul.addr %s213, 8
      %s215 = scalar_lea.vmem %s0, %s214
      %p216 = scmp.lt.s32.totalorder %s20, 1
      %s217 = scalar_select %p216, %s20, 1
      %p218 = scmp.lt.s32.totalorder %s19, 0
      %s219 = scalar_select %p218, %s19, 0
      %s220 = sadd.s32 %s219, %s217
      %s221 = smul.addr %s220, 8
      %s222 = scalar_lea.vmem %s1, %s221
      %p223 = scmp.lt.s32.totalorder %s19, 0
      %s224 = scalar_select %p223, %s19, 0
      %s225 = smul.addr %s224, 8
      %s226 = scalar_lea.vmem %s2, %s225
      %p227 = scmp.lt.s32.totalorder %s19, 0
      %s228 = scalar_select %p227, %s19, 0
      %s229 = smul.addr %s228, 8
      %s230 = scalar_lea.vmem %s3, %s229
      %p231 = scmp.eq.s32.totalorder %s20, 0
      // Predicated region
      $region29: #{softmax_focal_loss.1} parent=27 // pred_check
        %p232 = pneg %p231
      $region30: #{softmax_focal_loss.1} parent=27 // pred_check_branch
        %234 = sbr.rel (%p232) target = $region32
      $region31: #{softmax_focal_loss.1} parent=27 // pred_region
        %235 = vst [vmem:[#allocation2] sm:$0xff] 0.0
        %236 = vst [vmem:[#allocation3] sm:$0xff] 0.0
      $region32: #{softmax_focal_loss.1} parent=27 // pred_fallthru
        _
      %v237 = vld [vmem:[%s215] sm:$0xff]
      %v238 = vld [vmem:[%s215 + $0x8] sm:$0xff]
      %v239 = vld [vmem:[%s215 + $0x10] sm:$0xff]
      %v240 = vld [vmem:[%s215 + $0x18] sm:$0xff]
      %v241 = vld [vmem:[%s222] sm:$0xff]
      %v242 = vmax.f32 %v237, %v238
      %v243 = vmax.f32 %v239, %v240
      %v244 = vmax.f32 %v242, %v243
      %v245 = vsub.f32 %v237, %v244
      %v246 = vsub.f32 %v238, %v244
      %v247 = vsub.f32 %v239, %v244
      %v248 = vsub.f32 %v240, %v244
      %v249 = vmul.f32 %v245, 1.442695
      %v250 = vpow.pop %v249
      %v251 = vmul.f32 %v246, 1.442695
      %v252 = vpow.pop %v251
      %v253 = vmul.f32 %v247, 1.442695
      %v254 = vpow.pop %v253
      %v255 = vmul.f32 %v248, 1.442695
      %v256 = vpow.pop %v255
      %v257 = vadd.f32 %v250, %v252
      %v258 = vadd.f32 %v257, %v254
      %v259 = vadd.f32 %v258, %v256
      %vm260 = vcmp.eq.s32.totalorder %v241, 0
      %vm261 = vcmp.eq.s32.totalorder %v241, 1
      %vm262 = vcmp.eq.s32.totalorder %v241, 2
      %vm263 = vcmp.eq.s32.totalorder %v241, 3
      %v264 = vsel %vm260, %v237, 0.0
      %v265 = vsel %vm261, %v238, 0.0
      %v266 = vsel %vm262, %v239, 0.0
      %v267 = vsel %vm263, %v240, 0.0
      %v268 = vadd.f32 %v264, %v265
      %v269 = vadd.f32 %v268, %v266
      %v270 = vadd.f32 %v269, %v267
      %v271 = vsub.f32 %v270, %v244
      %v272 = vlog2.pop %v259
      %v273 = vmul.f32 %v272, 0.6931472
      %v274 = vsub.f32 %v271, %v273
      %v275 = vmul.f32 %v274, 1.442695
      %v276 = vpow.pop %v275
      %v277 = vsub.f32 1.0, %v276
      %v278 = vmax.f32 %v277, 0.0
      %v279 = vmul.f32 %v278, %v278
      %vm280 = vcmp.ne.s32.totalorder %v241, 255
      %v281 = vsub.f32 0.0, %v279
      %v282 = vmul.f32 %v281, %v274
      %v283 = vsel %vm280, %v282, 0.0
      %v284 = vld [vmem:[#allocation2] sm:$0xff]
      %v285 = vadd.f32 %v283, 0.0
      %v286 = vadd.f32 %v284, %v285
      %287 = vst [vmem:[#allocation2] sm:$0xff] %v286
      %v288 = vld [vmem:[#allocation3] sm:$0xff]
      %v289 = vsel %vm280, 1, 0
      %v290 = vcvt.s32.f32 %v289
      %v291 = vadd.f32 %v290, 0.0
      %v292 = vadd.f32 %v288, %v291
      %293 = vst [vmem:[#allocation3] sm:$0xff] %v292
      %p294 = scmp.eq.s32.totalorder %s20, 1
      // Predicated region
      $region33: #{softmax_focal_loss.1} parent=27 // pred_check
        %p295 = pneg %p294
      $region34: #{softmax_focal_loss.1} parent=27 // pred_check_branch
        %297 = sbr.rel (%p295) target = $region36
      $region35: #{softmax_focal_loss.1} parent=27 // pred_region
        %v298 = vld [vmem:[#allocation2] sm:$0xff]
        %299 = vst [vmem:[%s226] sm:$0xff] %v298
        %v300 = vld [vmem:[#allocation3] sm:$0xff]
        %301 = vst [vmem:[%s230] sm:$0xff] %v300
      $region36: #{softmax_focal_loss.1} parent=27 // pred_fallthru
        _
      %p302 = scmp.lt.s32.totalorder %s19, 0
      %s303 = scalar_select %p302, %s19, 0
      %s304 = smul.addr %s303, 8
      %s305 = scalar_lea.vmem %s2, %s304
      %p306 = scmp.lt.s32.totalorder %s19, 0
      %s307 = scalar_select %p306, %s19, 0
      %s308 = smul.addr %s307, 8
      %s309 = scalar_lea.vmem %s3, %s308
      // Predicated region
      $region37: #{softmax_focal_loss.1} parent=27 // pred_check
        %p310 = pneg %p101
      $region38: #{softmax_focal_loss.1} parent=27 // pred_check_branch
        %312 = sbr.rel (%p310) target = $region40
      $region39: #{softmax_focal_loss.1} parent=27 // pred_region
        _
      $region40: #{softmax_focal_loss.1} parent=27 // pred_fallthru
        _
      // Predicated region
      $region41: #{softmax_focal_loss.1} parent=27 // pred_check
        %p313 = pneg %p127
      $region42: #{softmax_focal_loss.1} parent=27 // pred_check_branch
        %315 = sbr.rel (%p313) target = $region44
      $region43: #{softmax_focal_loss.1} parent=27 // pred_region
        _
      $region44: #{softmax_focal_loss.1} parent=27 // pred_fallthru
        _
      // Predicated region
      $region45: #{softmax_focal_loss.1} parent=27 // pred_check
        %p316 = pneg %p101
      $region46: #{softmax_focal_loss.1} parent=27 // pred_check_branch
        %318 = sbr.rel (%p316) target = $region48
      $region47: #{softmax_focal_loss.1} parent=27 // pred_region
        %p319 = scmp.lt.s32.totalorder %s19, 0
        %s320 = scalar_select %p319, %s19, 0
        %s321 = smul.addr %s320, 8
        %s322 = scalar_lea.vmem %s2, %s321
      $region48: #{softmax_focal_loss.1} parent=27 // pred_fallthru
        _
      // Predicated region
      $region49: #{softmax_focal_loss.1} parent=27 // pred_check
        %p323 = pneg %p127
      $region50: #{softmax_focal_loss.1} parent=27 // pred_check_branch
        %325 = sbr.rel (%p323) target = $region52
      $region51: #{softmax_focal_loss.1} parent=27 // pred_region
        %p326 = scmp.lt.s32.totalorder %s19, 0
        %s327 = scalar_select %p326, %s19, 0
        %s328 = smul.addr %s327, 8
        %s329 = scalar_lea.vmem %s3, %s328
      $region52: #{softmax_focal_loss.1} parent=27 // pred_fallthru
        _
    $region28: #{softmax_focal_loss.1} parent=5 // pred_fallthru
      _
    %p330 = scmp.le.s32.totalorder 2, %s10
    // Predicated region
    $region53: #{softmax_focal_loss.1} parent=5 // pred_check
      %p331 = pneg %p330
    $region54: #{softmax_focal_loss.1} parent=5 // pred_check_branch
      %333 = sbr.rel (%p331) target = $region56
    $region55: #{softmax_focal_loss.1} parent=5 // pred_region
      %s334 = ssub.s32 %s10, 2
    $region56: #{softmax_focal_loss.1} parent=5 // pred_fallthru
      _
  $region6: #{softmax_focal_loss.1} parent=0 // loop_footer
    %s14 = sadd.s32 1, %s10
  $region7: #{softmax_focal_loss.1} parent=0 // loop_footer_branch
    %9 = sbr.rel target = $region3
  $region8: #{softmax_focal_loss.1} parent=0 // loop_exit
    _

</llo_original>
